<compile_context>
chip_gen: v6e
topology: v6e:2x2x1
jax: 0.10.0
libtpu: 0.0.40
codegen_flags: <defaults>
</compile_context>

<pallas_src>
import functools
import math

import jax
import jax.numpy as jnp
import numpy as np
from jax.experimental import pallas as pl
from jax.experimental.pallas import tpu as pltpu


def _ohem_ce_kernel(logits_ref, labels_ref, loss_ref, *, ignore_lb):
    """Per-block cross-entropy with ignore_index masking.

    logits_ref: (1, C, TH, W)  native dtype (f32 / bf16)
    labels_ref: (1, TH, W)     int32
    loss_ref:   (1, TH, W)     f32
    """
    C = logits_ref.shape[1]
    lbl = labels_ref[0, :, :]                               # (TH, W) i32

    # Running max over classes: plain VPU maximums across C per-class slabs.
    m = logits_ref[0, 0, :, :].astype(jnp.float32)
    for c in range(1, C):
        m = jnp.maximum(m, logits_ref[0, c, :, :].astype(jnp.float32))

    # Sum of exp + target-class logit gather, unrolled over the class axis.
    s = jnp.zeros_like(m)
    picked = jnp.zeros_like(m)
    for c in range(C):
        xc = logits_ref[0, c, :, :].astype(jnp.float32)
        s = s + jnp.exp(xc - m)
        picked = picked + jnp.where(lbl == c, xc, 0.0)

    lse = m + jnp.log(s)
    valid = lbl != ignore_lb
    # CrossEntropyLoss(reduction='none', ignore_index=...) gives 0 for ignored.
    loss_ref[0, :, :] = jnp.where(valid, lse - picked, 0.0)


def _pick_row_tile(H, W, C, itemsize, budget_bytes):
    """Largest TH that divides H, keeps the logits block under budget and
    satisfies the TPU block constraint (TH % 8 == 0 or TH == H)."""
    cands = [th for th in range(H, 0, -1)
             if H % th == 0 and (th % 8 == 0 or th == H)]
    for th in cands:
        if C * th * W * itemsize <= budget_bytes:
            return th
    return cands[-1]


def ohem_ce_loss(logits_nchw, labels, *, thresh=0.7, ignore_lb=255,
                 block_bytes=2 << 20):
    """OhemCELoss.forward(logits, labels) — logits NCHW, labels NHW int."""
    N, C, H, W = logits_nchw.shape
    labels = labels.astype(jnp.int32)
    itemsize = np.dtype(logits_nchw.dtype).itemsize

    # Big (multi-hundred-KiB .. MiB) blocks amortize the per-grid-step
    # overhead; budget is conservative so 2 inputs x 2 buffers + output fit
    # the 32 MiB scoped VMEM limit on every generation (incl. v7x's 64 MiB).
    TH = _pick_row_tile(H, W, C, itemsize, block_bytes)
    grid = (N, H // TH)

    kernel = functools.partial(_ohem_ce_kernel, ignore_lb=ignore_lb)

    loss_map = pl.pallas_call(
        kernel,
        out_shape=jax.ShapeDtypeStruct((N, H, W), jnp.float32),
        grid=grid,
        in_specs=[
            pl.BlockSpec((1, C, TH, W), lambda n, h: (n, 0, h, 0)),
            pl.BlockSpec((1, TH, W), lambda n, h: (n, h, 0)),
        ],
        out_specs=pl.BlockSpec((1, TH, W), lambda n, h: (n, h, 0)),
        compiler_params=pltpu.CompilerParams(
            dimension_semantics=("parallel", "parallel"),
            vmem_limit_bytes=32 * 1024 * 1024),
    )(logits_nchw, labels)

    thresh_val = float(-math.log(thresh))   # same as -torch.log(tensor(thresh))

    # Small OHEM reductions on the lane-dense loss map (plain JAX keeps the
    # Pallas grid fully parallel; counts accumulated as int32 — exact).
    n_valid = jnp.sum((labels != ignore_lb).astype(jnp.int32))
    above = loss_map > thresh_val           # torch semantics: ignored pixels have loss 0
    n_hard = jnp.sum(above.astype(jnp.int32))
    sum_above = jnp.sum(jnp.where(above, loss_map, 0.0))
    n_min = n_valid // 4                    # == int(0.25 * #non-ignored), exact

    loss_flat = loss_map.reshape(-1)

    def _mean_hard(_):
        return sum_above / jnp.maximum(n_hard, 1).astype(jnp.float32)

    def _topk_fallback(_):
        # TODO(synk): dynamic-k top-k has no clean Pallas equivalent; sort +
        # cumsum in plain JAX, executed only when this branch is taken.
        sorted_desc = jnp.flip(jnp.sort(loss_flat))
        csum = jnp.cumsum(sorted_desc)
        k = jnp.maximum(n_min, 1)
        return jnp.take(csum, k - 1) / k.astype(jnp.float32)

    # (degenerate n_hard == n_min == 0 would be NaN in torch; returns 0 here)
    return jax.lax.cond(n_hard >= n_min, _mean_hard, _topk_fallback, 0)


def _reference_numpy(logits_nchw, labels, thresh=0.7, ignore_lb=255):
    """Pure numpy re-implementation of the torch forward, for verification."""
    x = np.transpose(np.asarray(logits_nchw, np.float64), (0, 2, 3, 1))
    N, H, W, C = x.shape
    x = x.reshape(-1, C)
    lbl = np.asarray(labels).reshape(-1)
    m = x.max(-1, keepdims=True)
    lse = (m + np.log(np.exp(x - m).sum(-1, keepdims=True)))[:, 0]
    picked = x[np.arange(x.shape[0]), np.clip(lbl, 0, C - 1)]
    valid = lbl != ignore_lb
    loss = np.where(valid, lse - picked, 0.0)
    t = -math.log(thresh)
    n_min = int(valid.sum() * 0.25)
    hard = loss[loss > t]
    if hard.size < n_min:
        hard = np.sort(loss)[::-1][:n_min]
    return float(hard.mean())


if __name__ == "__main__":
    key = jax.random.PRNGKey(0)
    k1, k2, k3 = jax.random.split(key, 3)

    N, C, H, W = 2, 8, 16, 16                 # small demo shapes
    logits = jax.random.normal(k1, (N, C, H, W), jnp.float32) * 2.0
    labels = jax.random.randint(k2, (N, H, W), 0, C, jnp.int32)
    ignore_mask = jax.random.uniform(k3, (N, H, W)) < 0.1
    labels = jnp.where(ignore_mask, 255, labels).astype(jnp.int32)

    out = ohem_ce_loss(logits, labels, thresh=0.7, ignore_lb=255)
    out = jax.block_until_ready(out)

    ref = _reference_numpy(np.asarray(logits), np.asarray(labels), thresh=0.7)
    assert np.isfinite(float(out)), "non-finite kernel output"
    assert abs(float(out) - ref) < 5e-4, f"mismatch: pallas={float(out)} ref={ref}"

    print("KERNEL_OK")
</pallas_src>

<mosaic_0001>
module attributes {stable_mosaic.version = 11 : i64} {
  func.func @_ohem_ce_kernel(%arg0: i32, %arg1: i32, %arg2: memref<1x8x16x16xf32, #tpu.memory_space<vmem>>, %arg3: memref<1x16x16xi32, #tpu.memory_space<vmem>>, %arg4: memref<1x16x16xf32, #tpu.memory_space<vmem>>) attributes {dimension_semantics = [#tpu.dimension_semantics<parallel>, #tpu.dimension_semantics<parallel>], iteration_bounds = array<i64: 2, 1>, scalar_prefetch = 0 : i64, scratch_operands = 0 : i64, tpu.core_type = #tpu.core_type<tc>, window_params = [{transform_indices = @transform_0, window_bounds = array<i64: 1, 8, 16, 16>}, {transform_indices = @transform_1, window_bounds = array<i64: 1, 16, 16>}, {transform_indices = @transform_2, window_bounds = array<i64: 1, 16, 16>}]} {
    %c0 = arith.constant 0 : index
    %c0_0 = arith.constant 0 : index
    %c0_1 = arith.constant 0 : index
    %0 = vector.load %arg3[%c0, %c0_0, %c0_1] : memref<1x16x16xi32, #tpu.memory_space<vmem>>, vector<1x16x16xi32>
    %1 = vector.shape_cast %0 : vector<1x16x16xi32> to vector<16x16xi32>
    %c0_2 = arith.constant 0 : index
    %c0_3 = arith.constant 0 : index
    %c0_4 = arith.constant 0 : index
    %c0_5 = arith.constant 0 : index
    %2 = vector.load %arg2[%c0_2, %c0_3, %c0_4, %c0_5] : memref<1x8x16x16xf32, #tpu.memory_space<vmem>>, vector<1x1x16x16xf32>
    %3 = vector.shape_cast %2 : vector<1x1x16x16xf32> to vector<16x16xf32>
    %c0_6 = arith.constant 0 : index
    %c1 = arith.constant 1 : index
    %c0_7 = arith.constant 0 : index
    %c0_8 = arith.constant 0 : index
    %4 = vector.load %arg2[%c0_6, %c1, %c0_7, %c0_8] : memref<1x8x16x16xf32, #tpu.memory_space<vmem>>, vector<1x1x16x16xf32>
    %5 = vector.shape_cast %4 : vector<1x1x16x16xf32> to vector<16x16xf32>
    %6 = arith.maximumf %3, %5 : vector<16x16xf32>
    %c0_9 = arith.constant 0 : index
    %c2 = arith.constant 2 : index
    %c0_10 = arith.constant 0 : index
    %c0_11 = arith.constant 0 : index
    %7 = vector.load %arg2[%c0_9, %c2, %c0_10, %c0_11] : memref<1x8x16x16xf32, #tpu.memory_space<vmem>>, vector<1x1x16x16xf32>
    %8 = vector.shape_cast %7 : vector<1x1x16x16xf32> to vector<16x16xf32>
    %9 = arith.maximumf %6, %8 : vector<16x16xf32>
    %c0_12 = arith.constant 0 : index
    %c3 = arith.constant 3 : index
    %c0_13 = arith.constant 0 : index
    %c0_14 = arith.constant 0 : index
    %10 = vector.load %arg2[%c0_12, %c3, %c0_13, %c0_14] : memref<1x8x16x16xf32, #tpu.memory_space<vmem>>, vector<1x1x16x16xf32>
    %11 = vector.shape_cast %10 : vector<1x1x16x16xf32> to vector<16x16xf32>
    %12 = arith.maximumf %9, %11 : vector<16x16xf32>
    %c0_15 = arith.constant 0 : index
    %c4 = arith.constant 4 : index
    %c0_16 = arith.constant 0 : index
    %c0_17 = arith.constant 0 : index
    %13 = vector.load %arg2[%c0_15, %c4, %c0_16, %c0_17] : memref<1x8x16x16xf32, #tpu.memory_space<vmem>>, vector<1x1x16x16xf32>
    %14 = vector.shape_cast %13 : vector<1x1x16x16xf32> to vector<16x16xf32>
    %15 = arith.maximumf %12, %14 : vector<16x16xf32>
    %c0_18 = arith.constant 0 : index
    %c5 = arith.constant 5 : index
    %c0_19 = arith.constant 0 : index
    %c0_20 = arith.constant 0 : index
    %16 = vector.load %arg2[%c0_18, %c5, %c0_19, %c0_20] : memref<1x8x16x16xf32, #tpu.memory_space<vmem>>, vector<1x1x16x16xf32>
    %17 = vector.shape_cast %16 : vector<1x1x16x16xf32> to vector<16x16xf32>
    %18 = arith.maximumf %15, %17 : vector<16x16xf32>
    %c0_21 = arith.constant 0 : index
    %c6 = arith.constant 6 : index
    %c0_22 = arith.constant 0 : index
    %c0_23 = arith.constant 0 : index
    %19 = vector.load %arg2[%c0_21, %c6, %c0_22, %c0_23] : memref<1x8x16x16xf32, #tpu.memory_space<vmem>>, vector<1x1x16x16xf32>
    %20 = vector.shape_cast %19 : vector<1x1x16x16xf32> to vector<16x16xf32>
    %21 = arith.maximumf %18, %20 : vector<16x16xf32>
    %c0_24 = arith.constant 0 : index
    %c7 = arith.constant 7 : index
    %c0_25 = arith.constant 0 : index
    %c0_26 = arith.constant 0 : index
    %22 = vector.load %arg2[%c0_24, %c7, %c0_25, %c0_26] : memref<1x8x16x16xf32, #tpu.memory_space<vmem>>, vector<1x1x16x16xf32>
    %23 = vector.shape_cast %22 : vector<1x1x16x16xf32> to vector<16x16xf32>
    %24 = arith.maximumf %21, %23 : vector<16x16xf32>
    %cst = arith.constant 0.000000e+00 : f32
    %25 = vector.broadcast %cst : f32 to vector<16x16xf32>
    %cst_27 = arith.constant 0.000000e+00 : f32
    %26 = vector.broadcast %cst_27 : f32 to vector<16x16xf32>
    %c0_28 = arith.constant 0 : index
    %c0_29 = arith.constant 0 : index
    %c0_30 = arith.constant 0 : index
    %c0_31 = arith.constant 0 : index
    %27 = vector.load %arg2[%c0_28, %c0_29, %c0_30, %c0_31] : memref<1x8x16x16xf32, #tpu.memory_space<vmem>>, vector<1x1x16x16xf32>
    %28 = vector.shape_cast %27 : vector<1x1x16x16xf32> to vector<16x16xf32>
    %29 = arith.subf %28, %24 : vector<16x16xf32>
    %30 = math.exp %29 : vector<16x16xf32>
    %31 = arith.addf %25, %30 : vector<16x16xf32>
    %c0_i32 = arith.constant 0 : i32
    %32 = vector.broadcast %c0_i32 : i32 to vector<16x16xi32>
    %33 = arith.cmpi eq, %1, %32 : vector<16x16xi32>
    %cst_32 = arith.constant 0.000000e+00 : f32
    %34 = vector.broadcast %cst_32 : f32 to vector<16x16xf32>
    %35 = arith.select %33, %28, %34 : vector<16x16xi1>, vector<16x16xf32>
    %36 = arith.addf %26, %35 : vector<16x16xf32>
    %c0_33 = arith.constant 0 : index
    %c1_34 = arith.constant 1 : index
    %c0_35 = arith.constant 0 : index
    %c0_36 = arith.constant 0 : index
    %37 = vector.load %arg2[%c0_33, %c1_34, %c0_35, %c0_36] : memref<1x8x16x16xf32, #tpu.memory_space<vmem>>, vector<1x1x16x16xf32>
    %38 = vector.shape_cast %37 : vector<1x1x16x16xf32> to vector<16x16xf32>
    %39 = arith.subf %38, %24 : vector<16x16xf32>
    %40 = math.exp %39 : vector<16x16xf32>
    %41 = arith.addf %31, %40 : vector<16x16xf32>
    %c1_i32 = arith.constant 1 : i32
    %42 = vector.broadcast %c1_i32 : i32 to vector<16x16xi32>
    %43 = arith.cmpi eq, %1, %42 : vector<16x16xi32>
    %cst_37 = arith.constant 0.000000e+00 : f32
    %44 = vector.broadcast %cst_37 : f32 to vector<16x16xf32>
    %45 = arith.select %43, %38, %44 : vector<16x16xi1>, vector<16x16xf32>
    %46 = arith.addf %36, %45 : vector<16x16xf32>
    %c0_38 = arith.constant 0 : index
    %c2_39 = arith.constant 2 : index
    %c0_40 = arith.constant 0 : index
    %c0_41 = arith.constant 0 : index
    %47 = vector.load %arg2[%c0_38, %c2_39, %c0_40, %c0_41] : memref<1x8x16x16xf32, #tpu.memory_space<vmem>>, vector<1x1x16x16xf32>
    %48 = vector.shape_cast %47 : vector<1x1x16x16xf32> to vector<16x16xf32>
    %49 = arith.subf %48, %24 : vector<16x16xf32>
    %50 = math.exp %49 : vector<16x16xf32>
    %51 = arith.addf %41, %50 : vector<16x16xf32>
    %c2_i32 = arith.constant 2 : i32
    %52 = vector.broadcast %c2_i32 : i32 to vector<16x16xi32>
    %53 = arith.cmpi eq, %1, %52 : vector<16x16xi32>
    %cst_42 = arith.constant 0.000000e+00 : f32
    %54 = vector.broadcast %cst_42 : f32 to vector<16x16xf32>
    %55 = arith.select %53, %48, %54 : vector<16x16xi1>, vector<16x16xf32>
    %56 = arith.addf %46, %55 : vector<16x16xf32>
    %c0_43 = arith.constant 0 : index
    %c3_44 = arith.constant 3 : index
    %c0_45 = arith.constant 0 : index
    %c0_46 = arith.constant 0 : index
    %57 = vector.load %arg2[%c0_43, %c3_44, %c0_45, %c0_46] : memref<1x8x16x16xf32, #tpu.memory_space<vmem>>, vector<1x1x16x16xf32>
    %58 = vector.shape_cast %57 : vector<1x1x16x16xf32> to vector<16x16xf32>
    %59 = arith.subf %58, %24 : vector<16x16xf32>
    %60 = math.exp %59 : vector<16x16xf32>
    %61 = arith.addf %51, %60 : vector<16x16xf32>
    %c3_i32 = arith.constant 3 : i32
    %62 = vector.broadcast %c3_i32 : i32 to vector<16x16xi32>
    %63 = arith.cmpi eq, %1, %62 : vector<16x16xi32>
    %cst_47 = arith.constant 0.000000e+00 : f32
    %64 = vector.broadcast %cst_47 : f32 to vector<16x16xf32>
    %65 = arith.select %63, %58, %64 : vector<16x16xi1>, vector<16x16xf32>
    %66 = arith.addf %56, %65 : vector<16x16xf32>
    %c0_48 = arith.constant 0 : index
    %c4_49 = arith.constant 4 : index
    %c0_50 = arith.constant 0 : index
    %c0_51 = arith.constant 0 : index
    %67 = vector.load %arg2[%c0_48, %c4_49, %c0_50, %c0_51] : memref<1x8x16x16xf32, #tpu.memory_space<vmem>>, vector<1x1x16x16xf32>
    %68 = vector.shape_cast %67 : vector<1x1x16x16xf32> to vector<16x16xf32>
    %69 = arith.subf %68, %24 : vector<16x16xf32>
    %70 = math.exp %69 : vector<16x16xf32>
    %71 = arith.addf %61, %70 : vector<16x16xf32>
    %c4_i32 = arith.constant 4 : i32
    %72 = vector.broadcast %c4_i32 : i32 to vector<16x16xi32>
    %73 = arith.cmpi eq, %1, %72 : vector<16x16xi32>
    %cst_52 = arith.constant 0.000000e+00 : f32
    %74 = vector.broadcast %cst_52 : f32 to vector<16x16xf32>
    %75 = arith.select %73, %68, %74 : vector<16x16xi1>, vector<16x16xf32>
    %76 = arith.addf %66, %75 : vector<16x16xf32>
    %c0_53 = arith.constant 0 : index
    %c5_54 = arith.constant 5 : index
    %c0_55 = arith.constant 0 : index
    %c0_56 = arith.constant 0 : index
    %77 = vector.load %arg2[%c0_53, %c5_54, %c0_55, %c0_56] : memref<1x8x16x16xf32, #tpu.memory_space<vmem>>, vector<1x1x16x16xf32>
    %78 = vector.shape_cast %77 : vector<1x1x16x16xf32> to vector<16x16xf32>
    %79 = arith.subf %78, %24 : vector<16x16xf32>
    %80 = math.exp %79 : vector<16x16xf32>
    %81 = arith.addf %71, %80 : vector<16x16xf32>
    %c5_i32 = arith.constant 5 : i32
    %82 = vector.broadcast %c5_i32 : i32 to vector<16x16xi32>
    %83 = arith.cmpi eq, %1, %82 : vector<16x16xi32>
    %cst_57 = arith.constant 0.000000e+00 : f32
    %84 = vector.broadcast %cst_57 : f32 to vector<16x16xf32>
    %85 = arith.select %83, %78, %84 : vector<16x16xi1>, vector<16x16xf32>
    %86 = arith.addf %76, %85 : vector<16x16xf32>
    %c0_58 = arith.constant 0 : index
    %c6_59 = arith.constant 6 : index
    %c0_60 = arith.constant 0 : index
    %c0_61 = arith.constant 0 : index
    %87 = vector.load %arg2[%c0_58, %c6_59, %c0_60, %c0_61] : memref<1x8x16x16xf32, #tpu.memory_space<vmem>>, vector<1x1x16x16xf32>
    %88 = vector.shape_cast %87 : vector<1x1x16x16xf32> to vector<16x16xf32>
    %89 = arith.subf %88, %24 : vector<16x16xf32>
    %90 = math.exp %89 : vector<16x16xf32>
    %91 = arith.addf %81, %90 : vector<16x16xf32>
    %c6_i32 = arith.constant 6 : i32
    %92 = vector.broadcast %c6_i32 : i32 to vector<16x16xi32>
    %93 = arith.cmpi eq, %1, %92 : vector<16x16xi32>
    %cst_62 = arith.constant 0.000000e+00 : f32
    %94 = vector.broadcast %cst_62 : f32 to vector<16x16xf32>
    %95 = arith.select %93, %88, %94 : vector<16x16xi1>, vector<16x16xf32>
    %96 = arith.addf %86, %95 : vector<16x16xf32>
    %c0_63 = arith.constant 0 : index
    %c7_64 = arith.constant 7 : index
    %c0_65 = arith.constant 0 : index
    %c0_66 = arith.constant 0 : index
    %97 = vector.load %arg2[%c0_63, %c7_64, %c0_65, %c0_66] : memref<1x8x16x16xf32, #tpu.memory_space<vmem>>, vector<1x1x16x16xf32>
    %98 = vector.shape_cast %97 : vector<1x1x16x16xf32> to vector<16x16xf32>
    %99 = arith.subf %98, %24 : vector<16x16xf32>
    %100 = math.exp %99 : vector<16x16xf32>
    %101 = arith.addf %91, %100 : vector<16x16xf32>
    %c7_i32 = arith.constant 7 : i32
    %102 = vector.broadcast %c7_i32 : i32 to vector<16x16xi32>
    %103 = arith.cmpi eq, %1, %102 : vector<16x16xi32>
    %cst_67 = arith.constant 0.000000e+00 : f32
    %104 = vector.broadcast %cst_67 : f32 to vector<16x16xf32>
    %105 = arith.select %103, %98, %104 : vector<16x16xi1>, vector<16x16xf32>
    %106 = arith.addf %96, %105 : vector<16x16xf32>
    %107 = math.log %101 : vector<16x16xf32>
    %108 = arith.addf %24, %107 : vector<16x16xf32>
    %c255_i32 = arith.constant 255 : i32
    %109 = vector.broadcast %c255_i32 : i32 to vector<16x16xi32>
    %110 = arith.cmpi ne, %1, %109 : vector<16x16xi32>
    %111 = arith.subf %108, %106 : vector<16x16xf32>
    %cst_68 = arith.constant 0.000000e+00 : f32
    %112 = vector.broadcast %cst_68 : f32 to vector<16x16xf32>
    %113 = arith.select %110, %111, %112 : vector<16x16xi1>, vector<16x16xf32>
    %c0_69 = arith.constant 0 : index
    %c0_70 = arith.constant 0 : index
    %c0_71 = arith.constant 0 : index
    %114 = vector.load %arg4[%c0_69, %c0_70, %c0_71] : memref<1x16x16xf32, #tpu.memory_space<vmem>>, vector<1x16x16xf32>
    %115 = vector.shape_cast %114 : vector<1x16x16xf32> to vector<16x16xf32>
    %116 = vector.shape_cast %113 : vector<16x16xf32> to vector<1x16x16xf32>
    tpu.vector_store %arg4[%c0_69, %c0_70, %c0_71], %116 {strides = array<i32>} : memref<1x16x16xf32, #tpu.memory_space<vmem>>, vector<1x16x16xf32>,
    return
  }
  func.func @transform_0(%arg0: i32, %arg1: i32) -> (i32, i32, i32, i32) {
    %c0_i32 = arith.constant 0 : i32
    %c0_i32_0 = arith.constant 0 : i32
    %c0_i32_1 = arith.constant 0 : i32
    return %arg0, %c0_i32, %arg1, %c0_i32_0 : i32, i32, i32, i32
  }
  func.func @transform_1(%arg0: i32, %arg1: i32) -> (i32, i32, i32) {
    %c0_i32 = arith.constant 0 : i32
    %c0_i32_0 = arith.constant 0 : i32
    return %arg0, %arg1, %c0_i32 : i32, i32, i32
  }
  func.func @transform_2(%arg0: i32, %arg1: i32) -> (i32, i32, i32) {
    %c0_i32 = arith.constant 0 : i32
    %c0_i32_0 = arith.constant 0 : i32
    return %arg0, %arg1, %c0_i32 : i32, i32, i32
  }
}

</mosaic_0001>

<llo_original>
// kernel: tpu_custom_call.1
$region0: #{tpu_custom_call.1}
  #allocation0 [shape = 'u32[]', space=smem, size = 0x4, offset = 0x4, fixed_abs, tag = 'smem constant byte address 0x4 - core index']
  #allocation1 [shape = 'u32[144,128]{1,0:T(1,128)}', space=vmem, size = 0x12000, scoped, tag = 'internal scratch']
  %s0 = inlined_call_operand.hbm [shape: f32[2,8,16,16], index: 0, kind: input, shape index: {}]
  %s1 = inlined_call_operand.hbm [shape: s32[2,16,16], index: 1, kind: input, shape index: {}]
  %s2 = inlined_call_operand.hbm [shape: f32[2,16,16], index: 2, kind: output, shape index: {}]
  %s3 = sld [smem:[#allocation0]]
  $region49: #{tpu_custom_call.1} parent=0
    _
  %s5 = ssub.s32 1, %s3
  %s6 = scalar_select 0, %s5, %s3
  $region1: #{tpu_custom_call.1} parent=0
    #allocation2 [shape = 'u8[131072]{0}', space=vmem, size = 0x20000, scoped, tag = 'input window, operand 0']
    #allocation3 [shape = 's32[2]{0}', space=sflag, size = 0x8, scoped, tag = 'scoped memory for tpu_custom_call.1']
    #allocation4 [shape = 's32[2]{0}', space=sflag, size = 0x8, scoped, tag = 'scoped memory for tpu_custom_call.1']
    #allocation5 [shape = 'u8[16384]{0}', space=vmem, size = 0x4000, scoped, tag = 'input window, operand 1']
    #allocation6 [shape = 's32[2]{0}', space=sflag, size = 0x8, scoped, tag = 'scoped memory for tpu_custom_call.1']
    #allocation7 [shape = 'u8[16384]{0}', space=vmem, size = 0x4000, scoped, tag = 'output window, operand 0']
    %7 = vsyncpa [#allocation3], 0
    %s8 = scalar_lea.sflag [#allocation3], 1
    %9 = vsyncpa %s8, 0
    %10 = vsyncpa [#allocation6], 0
    %s11 = scalar_lea.sflag [#allocation6], 1
    %12 = vsyncpa %s11, 0
    %13 = vsyncpa [#allocation4], 0
    %s14 = scalar_lea.sflag [#allocation4], 1
    %15 = vsyncpa %s14, 0
    loop: start=0, step=1, limit=4
    $region2: #{tpu_custom_call.1} parent=1 // loop_pre_header
      _
    $region3: #{tpu_custom_call.1} parent=1 // loop_header
      %s17 = sphi 0, %s21
      %p18 = scmp.ge.s32.totalorder %s17, 4
      %s24 = sphi 0, %s36
      %s25 = sphi 0, %s32
      %s26 = sphi 0, %s24
      %s27 = sphi 0, %s25
      %s28 = sphi 0, %s26
      %s29 = sphi 0, %s27
      %s41 = sphi 0, %s43
      %s44 = sphi 0, %s41
      %s45 = sphi 0, %s44
      %s61 = sphi 0, %s45
      %s69 = sphi 0, %s71
      %s72 = sphi 0, %s69
      %s73 = sphi 0, %s72
      %s89 = sphi 0, %s73
      %s97 = sphi 0, %s99
      %s100 = sphi 0, %s97
      %s101 = sphi 0, %s100
      %s117 = sphi 0, %s101
    $region4: #{tpu_custom_call.1} parent=1 // loop_header_branch
      %20 = sbr.rel (%p18) target = $region8
    $region5: #{tpu_custom_call.1} parent=1 // loop_body
      %s22 = ssub.s32 %s17, 1
      %s23 = ssub.s32 %s17, 2
      %s30 = sadd.s32 1, %s25
      %p31 = scmp.ge.s32.totalorder %s30, 1
      %s32 = scalar_select %p31, 0, %s30
      %s33 = sadd.s32 1, %s24
      %s34 = scalar_select %p31, %s33, %s24
      %p35 = scmp.ge.s32.totalorder %s34, 2
      %s36 = scalar_select %p35, 0, %s34
      %s37 = ssub.s32 %s24, %s36
      %s38 = ssub.s32 %s25, %s32
      %s39 = sor.u32 %s37, %s38
      %p40 = scmp.eq.s32.totalorder %s39, 0
      %s42 = sadd.s32 %s41, 1
      %s43 = scalar_select %p40, %s41, %s42
      %p46 = pneg %p40
      %p47 = scmp.eq.s32.totalorder %s17, 1
      %p48 = por %p46, %p47
      %p49 = scmp.ne.s32.totalorder %s41, %s44
      %p50 = scmp.eq.s32.totalorder %s17, 0
      %p51 = por %p49, %p50
      %p52 = scmp.ne.s32.totalorder %s41, %s44
      %p53 = scmp.eq.s32.totalorder %s22, 1
      %p54 = por %p52, %p53
      %p55 = scmp.ne.s32.totalorder %s44, %s45
      %p56 = scmp.eq.s32.totalorder %s22, 0
      %p57 = por %p55, %p56
      %p58 = scmp.ne.s32.totalorder %s44, %s45
      %p59 = scmp.eq.s32.totalorder %s23, 1
      %p60 = por %p58, %p59
      %p62 = scmp.ne.s32.totalorder %s45, %s61
      %p63 = scmp.eq.s32.totalorder %s23, 0
      %p64 = por %p62, %p63
      %s65 = ssub.s32 %s24, %s36
      %s66 = ssub.s32 %s25, %s32
      %s67 = sor.u32 %s65, %s66
      %p68 = scmp.eq.s32.totalorder %s67, 0
      %s70 = sadd.s32 %s69, 1
      %s71 = scalar_select %p68, %s69, %s70
      %p74 = pneg %p68
      %p75 = scmp.eq.s32.totalorder %s17, 1
      %p76 = por %p74, %p75
      %p77 = scmp.ne.s32.totalorder %s69, %s72
      %p78 = scmp.eq.s32.totalorder %s17, 0
      %p79 = por %p77, %p78
      %p80 = scmp.ne.s32.totalorder %s69, %s72
      %p81 = scmp.eq.s32.totalorder %s22, 1
      %p82 = por %p80, %p81
      %p83 = scmp.ne.s32.totalorder %s72, %s73
      %p84 = scmp.eq.s32.totalorder %s22, 0
      %p85 = por %p83, %p84
      %p86 = scmp.ne.s32.totalorder %s72, %s73
      %p87 = scmp.eq.s32.totalorder %s23, 1
      %p88 = por %p86, %p87
      %p90 = scmp.ne.s32.totalorder %s73, %s89
      %p91 = scmp.eq.s32.totalorder %s23, 0
      %p92 = por %p90, %p91
      %s93 = ssub.s32 %s24, %s36
      %s94 = ssub.s32 %s25, %s32
      %s95 = sor.u32 %s93, %s94
      %p96 = scmp.eq.s32.totalorder %s95, 0
      %s98 = sadd.s32 %s97, 1
      %s99 = scalar_select %p96, %s97, %s98
      %p102 = pneg %p96
      %p103 = scmp.eq.s32.totalorder %s17, 1
      %p104 = por %p102, %p103
      %p105 = scmp.ne.s32.totalorder %s97, %s100
      %p106 = scmp.eq.s32.totalorder %s17, 0
      %p107 = por %p105, %p106
      %p108 = scmp.ne.s32.totalorder %s97, %s100
      %p109 = scmp.eq.s32.totalorder %s22, 1
      %p110 = por %p108, %p109
      %p111 = scmp.ne.s32.totalorder %s100, %s101
      %p112 = scmp.eq.s32.totalorder %s22, 0
      %p113 = por %p111, %p112
      %p114 = scmp.ne.s32.totalorder %s100, %s101
      %p115 = scmp.eq.s32.totalorder %s23, 1
      %p116 = por %p114, %p115
      %p118 = scmp.ne.s32.totalorder %s101, %s117
      %p119 = scmp.eq.s32.totalorder %s23, 0
      %p120 = por %p118, %p119
      %p121 = scmp.le.s32.totalorder 1, %s17
      %p122 = scmp.lt.s32.totalorder %s17, 3
      %p123 = pnand %p121, %p122
      %p124 = pneg %p123
      // Predicated region
      $region9: #{tpu_custom_call.1} parent=5 // pred_check
        _
      $region10: #{tpu_custom_call.1} parent=5 // pred_check_branch
        %126 = sbr.rel (%p123) target = $region12
      $region11: #{tpu_custom_call.1} parent=5 // pred_region
        %s127 = ssub.s32 %s17, 1
      $region12: #{tpu_custom_call.1} parent=5 // pred_fallthru
        _
      %p128 = scmp.lt.s32.totalorder %s17, 2
      // Predicated region
      $region13: #{tpu_custom_call.1} parent=5 // pred_check
        %p129 = pneg %p128
      $region14: #{tpu_custom_call.1} parent=5 // pred_check_branch
        %131 = sbr.rel (%p129) target = $region16
      $region15: #{tpu_custom_call.1} parent=5 // pred_region
        // Predicated region
        $region17: #{tpu_custom_call.1} parent=15 // pred_check
          %p132 = pneg %p51
        $region18: #{tpu_custom_call.1} parent=15 // pred_check_branch
          %134 = sbr.rel (%p132) target = $region20
        $region19: #{tpu_custom_call.1} parent=15 // pred_region
          %s135 = sand.u32 %s41, 1
          %s136 = scalar_lea.sflag [#allocation3], %s135
          %s137 = sand.u32 %s41, 1
          %s138 = smul.addr %s137, 128
          %s139 = scalar_lea.vmem [#allocation2], %s138
          %s140 = smul.u32 2, %s25
          %s142 = ssub.s32 2048, 2048
          %143 = vsyncadd %s136, %s142
          %s144 = smul.addr %s24, 16
          %s145 = sadd.s32 %s140, %s144
          %s146 = smul.addr %s145, 128
          %s147 = scalar_lea.hbm %s0, %s146
          %s148 = sshll.u32 %s139, 4
          %s149 = int_to_ptr.vmem [resolvable:$true] %s148
          %154 = dma.hbm_to_vmem [thread:$0]  %s147, 2048, %s149, %s136, 128, 128, 8
        $region20: #{tpu_custom_call.1} parent=15 // pred_fallthru
          _
        // Predicated region
        $region21: #{tpu_custom_call.1} parent=15 // pred_check
          %p155 = pneg %p79
        $region22: #{tpu_custom_call.1} parent=15 // pred_check_branch
          %157 = sbr.rel (%p155) target = $region24
        $region23: #{tpu_custom_call.1} parent=15 // pred_region
          %s158 = sand.u32 %s69, 1
          %s159 = scalar_lea.sflag [#allocation6], %s158
          %s160 = sand.u32 %s69, 1
          %s161 = smul.addr %s160, 16
          %s162 = scalar_lea.vmem [#allocation5], %s161
          %s163 = smul.u32 2, %s25
          %s165 = ssub.s32 256, 256
          %166 = vsyncadd %s159, %s165
          %s167 = smul.addr %s24, 2
          %s168 = sadd.s32 %s163, %s167
          %s169 = smul.addr %s168, 128
          %s170 = scalar_lea.hbm %s1, %s169
          %s171 = sshll.u32 %s162, 4
          %s172 = int_to_ptr.vmem [resolvable:$true] %s171
          %177 = dma.hbm_to_vmem [thread:$0]  %s170, 256, %s172, %s159, 128, 128, 8
        $region24: #{tpu_custom_call.1} parent=15 // pred_fallthru
          _
      $region16: #{tpu_custom_call.1} parent=5 // pred_fallthru
        _
      %p178 = scmp.le.s32.totalorder 1, %s17
      %p179 = scmp.lt.s32.totalorder %s17, 3
      %p180 = pnand %p178, %p179
      %p181 = pneg %p180
      // Predicated region
      $region25: #{tpu_custom_call.1} parent=5 // pred_check
        _
      $region26: #{tpu_custom_call.1} parent=5 // pred_check_branch
        %183 = sbr.rel (%p180) target = $region28
      $region27: #{tpu_custom_call.1} parent=5 // pred_region
        %s184 = ssub.s32 %s17, 1
        %s185 = sand.u32 %s44, 1
        %s186 = scalar_lea.sflag [#allocation3], %s185
        %s187 = sand.u32 %s44, 1
        %s188 = smul.addr %s187, 128
        %s189 = scalar_lea.vmem [#allocation2], %s188
        // Predicated region
        $region29: #{tpu_custom_call.1} parent=27 // pred_check
          %p190 = pneg %p57
        $region30: #{tpu_custom_call.1} parent=27 // pred_check_branch
          %192 = sbr.rel (%p190) target = $region32
        $region31: #{tpu_custom_call.1} parent=27 // pred_region
          %193 = dma.done %s186, 2048
        $region32: #{tpu_custom_call.1} parent=27 // pred_fallthru
          _
        %s194 = sand.u32 %s72, 1
        %s195 = scalar_lea.sflag [#allocation6], %s194
        %s196 = sand.u32 %s72, 1
        %s197 = smul.addr %s196, 16
        %s198 = scalar_lea.vmem [#allocation5], %s197
        // Predicated region
        $region33: #{tpu_custom_call.1} parent=27 // pred_check
          %p199 = pneg %p85
        $region34: #{tpu_custom_call.1} parent=27 // pred_check_branch
          %201 = sbr.rel (%p199) target = $region36
        $region35: #{tpu_custom_call.1} parent=27 // pred_region
          %202 = dma.done %s195, 256
        $region36: #{tpu_custom_call.1} parent=27 // pred_fallthru
          _
        %s203 = sand.u32 %s44, 1
        %s204 = scalar_lea.sflag [#allocation3], %s203
        %s205 = sand.u32 %s44, 1
        %s206 = smul.addr %s205, 128
        %s207 = scalar_lea.vmem [#allocation2], %s206
        %p208 = pneg %p57
        %p209 = pneg %p54
        %s210 = sand.u32 %s72, 1
        %s211 = scalar_lea.sflag [#allocation6], %s210
        %s212 = sand.u32 %s72, 1
        %s213 = smul.addr %s212, 16
        %s214 = scalar_lea.vmem [#allocation5], %s213
        %p215 = pneg %p85
        %p216 = pneg %p82
        %p217 = pneg %p113
        %p218 = pneg %p110
        %s219 = sand.u32 %s100, 1
        %s220 = scalar_lea.sflag [#allocation4], %s219
        %s221 = sand.u32 %s100, 1
        %s222 = smul.addr %s221, 16
        %s223 = scalar_lea.vmem [#allocation7], %s222
        %s224 = smul.u32 2, %s27
        %s225 = smul.u32 2, %s27
        %s226 = smul.u32 2, %s27
        %v227 = vld [vmem:[%s198] sm:$0xff]
        %v228 = vld [vmem:[%s198 + $0x8] sm:$0xff]
        %v229 = vld [vmem:[%s189] sm:$0xff]
        %v230 = vld [vmem:[%s189 + $0x8] sm:$0xff]
        %s231 = scalar_lea.vmem %s189, 16 [#allocation2]
        %v232 = vld [vmem:[%s231] sm:$0xff]
        %v233 = vld [vmem:[%s231 + $0x8] sm:$0xff]
        %v234 = vmax.f32 %v229, %v232
        %v235 = vmax.f32 %v230, %v233
        %s236 = scalar_lea.vmem %s189, 32 [#allocation2]
        %v237 = vld [vmem:[%s236] sm:$0xff]
        %v238 = vld [vmem:[%s236 + $0x8] sm:$0xff]
        %v239 = vmax.f32 %v234, %v237
        %v240 = vmax.f32 %v235, %v238
        %s241 = scalar_lea.vmem %s189, 48 [#allocation2]
        %v242 = vld [vmem:[%s241] sm:$0xff]
        %v243 = vld [vmem:[%s241 + $0x8] sm:$0xff]
        %v244 = vmax.f32 %v239, %v242
        %v245 = vmax.f32 %v240, %v243
        %s246 = scalar_lea.vmem %s189, 64 [#allocation2]
        %v247 = vld [vmem:[%s246] sm:$0xff]
        %v248 = vld [vmem:[%s246 + $0x8] sm:$0xff]
        %v249 = vmax.f32 %v244, %v247
        %v250 = vmax.f32 %v245, %v248
        %s251 = scalar_lea.vmem %s189, 80 [#allocation2]
        %v252 = vld [vmem:[%s251] sm:$0xff]
        %v253 = vld [vmem:[%s251 + $0x8] sm:$0xff]
        %v254 = vmax.f32 %v249, %v252
        %v255 = vmax.f32 %v250, %v253
        %s256 = scalar_lea.vmem %s189, 96 [#allocation2]
        %v257 = vld [vmem:[%s256] sm:$0xff]
        %v258 = vld [vmem:[%s256 + $0x8] sm:$0xff]
        %v259 = vmax.f32 %v254, %v257
        %v260 = vmax.f32 %v255, %v258
        %s261 = scalar_lea.vmem %s189, 112 [#allocation2]
        %v262 = vld [vmem:[%s261] sm:$0xff]
        %v263 = vld [vmem:[%s261 + $0x8] sm:$0xff]
        %v264 = vmax.f32 %v259, %v262
        %v265 = vmax.f32 %v260, %v263
        %v266 = vsub.f32 %v229, %v264
        %v267 = vsub.f32 %v230, %v265
        %v268 = vmul.f32 %v266, 1.442695
        %v269 = vpow.pop %v268
        %v270 = vmul.f32 %v267, 1.442695
        %v271 = vpow.pop %v270
        %v272 = vadd.f32 %v269, 0.0
        %v273 = vadd.f32 %v271, 0.0
        %vm274 = vcmp.eq.s32.totalorder %v227, 0
        %vm275 = vcmp.eq.s32.totalorder %v228, 0
        %v276 = vsel %vm274, %v229, 0.0
        %v277 = vsel %vm275, %v230, 0.0
        %v278 = vadd.f32 %v276, 0.0
        %v279 = vadd.f32 %v277, 0.0
        %v280 = vsub.f32 %v232, %v264
        %v281 = vsub.f32 %v233, %v265
        %v282 = vmul.f32 %v280, 1.442695
        %v283 = vpow.pop %v282
        %v284 = vmul.f32 %v281, 1.442695
        %v285 = vpow.pop %v284
        %v286 = vadd.f32 %v272, %v283
        %v287 = vadd.f32 %v273, %v285
        %vm288 = vcmp.eq.s32.totalorder %v227, 1
        %vm289 = vcmp.eq.s32.totalorder %v228, 1
        %v290 = vsel %vm288, %v232, 0.0
        %v291 = vsel %vm289, %v233, 0.0
        %v292 = vadd.f32 %v278, %v290
        %v293 = vadd.f32 %v279, %v291
        %v294 = vsub.f32 %v237, %v264
        %v295 = vsub.f32 %v238, %v265
        %v296 = vmul.f32 %v294, 1.442695
        %v297 = vpow.pop %v296
        %v298 = vmul.f32 %v295, 1.442695
        %v299 = vpow.pop %v298
        %v300 = vadd.f32 %v286, %v297
        %v301 = vadd.f32 %v287, %v299
        %vm302 = vcmp.eq.s32.totalorder %v227, 2
        %vm303 = vcmp.eq.s32.totalorder %v228, 2
        %v304 = vsel %vm302, %v237, 0.0
        %v305 = vsel %vm303, %v238, 0.0
        %v306 = vadd.f32 %v292, %v304
        %v307 = vadd.f32 %v293, %v305
        %v308 = vsub.f32 %v242, %v264
        %v309 = vsub.f32 %v243, %v265
        %v310 = vmul.f32 %v308, 1.442695
        %v311 = vpow.pop %v310
        %v312 = vmul.f32 %v309, 1.442695
        %v313 = vpow.pop %v312
        %v314 = vadd.f32 %v300, %v311
        %v315 = vadd.f32 %v301, %v313
        %vm316 = vcmp.eq.s32.totalorder %v227, 3
        %vm317 = vcmp.eq.s32.totalorder %v228, 3
        %v318 = vsel %vm316, %v242, 0.0
        %v319 = vsel %vm317, %v243, 0.0
        %v320 = vadd.f32 %v306, %v318
        %v321 = vadd.f32 %v307, %v319
        %v322 = vsub.f32 %v247, %v264
        %v323 = vsub.f32 %v248, %v265
        %v324 = vmul.f32 %v322, 1.442695
        %v325 = vpow.pop %v324
        %v326 = vmul.f32 %v323, 1.442695
        %v327 = vpow.pop %v326
        %v328 = vadd.f32 %v314, %v325
        %v329 = vadd.f32 %v315, %v327
        %vm330 = vcmp.eq.s32.totalorder %v227, 4
        %vm331 = vcmp.eq.s32.totalorder %v228, 4
        %v332 = vsel %vm330, %v247, 0.0
        %v333 = vsel %vm331, %v248, 0.0
        %v334 = vadd.f32 %v320, %v332
        %v335 = vadd.f32 %v321, %v333
        %v336 = vsub.f32 %v252, %v264
        %v337 = vsub.f32 %v253, %v265
        %v338 = vmul.f32 %v336, 1.442695
        %v339 = vpow.pop %v338
        %v340 = vmul.f32 %v337, 1.442695
        %v341 = vpow.pop %v340
        %v342 = vadd.f32 %v328, %v339
        %v343 = vadd.f32 %v329, %v341
        %vm344 = vcmp.eq.s32.totalorder %v227, 5
        %vm345 = vcmp.eq.s32.totalorder %v228, 5
        %v346 = vsel %vm344, %v252, 0.0
        %v347 = vsel %vm345, %v253, 0.0
        %v348 = vadd.f32 %v334, %v346
        %v349 = vadd.f32 %v335, %v347
        %v350 = vsub.f32 %v257, %v264
        %v351 = vsub.f32 %v258, %v265
        %v352 = vmul.f32 %v350, 1.442695
        %v353 = vpow.pop %v352
        %v354 = vmul.f32 %v351, 1.442695
        %v355 = vpow.pop %v354
        %v356 = vadd.f32 %v342, %v353
        %v357 = vadd.f32 %v343, %v355
        %vm358 = vcmp.eq.s32.totalorder %v227, 6
        %vm359 = vcmp.eq.s32.totalorder %v228, 6
        %v360 = vsel %vm358, %v257, 0.0
        %v361 = vsel %vm359, %v258, 0.0
        %v362 = vadd.f32 %v348, %v360
        %v363 = vadd.f32 %v349, %v361
        %v364 = vsub.f32 %v262, %v264
        %v365 = vsub.f32 %v263, %v265
        %v366 = vmul.f32 %v364, 1.442695
        %v367 = vpow.pop %v366
        %v368 = vmul.f32 %v365, 1.442695
        %v369 = vpow.pop %v368
        %v370 = vadd.f32 %v356, %v367
        %v371 = vadd.f32 %v357, %v369
        %vm372 = vcmp.eq.s32.totalorder %v227, 7
        %vm373 = vcmp.eq.s32.totalorder %v228, 7
        %v374 = vsel %vm372, %v262, 0.0
        %v375 = vsel %vm373, %v263, 0.0
        %v376 = vadd.f32 %v362, %v374
        %v377 = vadd.f32 %v363, %v375
        %v378 = vlog2.pop %v370
        %v379 = vmul.f32 %v378, 0.6931472
        %v380 = vlog2.pop %v371
        %v381 = vmul.f32 %v380, 0.6931472
        %v382 = vadd.f32 %v264, %v379
        %v383 = vadd.f32 %v265, %v381
        %vm384 = vcmp.ne.s32.totalorder %v227, 255
        %vm385 = vcmp.ne.s32.totalorder %v228, 255
        %v386 = vsub.f32 %v382, %v376
        %v387 = vsub.f32 %v383, %v377
        %v388 = vsel %vm384, %v386, 0.0
        %v389 = vsel %vm385, %v387, 0.0
        %vm390 = vcmask 130048
        %391 = vst.msk [vmem:[%s223] sm:$0xff] %vm390, %v388
        %392 = vst.msk [vmem:[%s223 + $0x8] sm:$0xff] %vm390, %v389
        %s393 = sand.u32 %s100, 1
        %s394 = scalar_lea.sflag [#allocation4], %s393
        %s395 = sand.u32 %s100, 1
        %s396 = smul.addr %s395, 16
        %s397 = scalar_lea.vmem [#allocation7], %s396
        // Predicated region
        $region37: #{tpu_custom_call.1} parent=27 // pred_check
          %p398 = pneg %p110
        $region38: #{tpu_custom_call.1} parent=27 // pred_check_branch
          %400 = sbr.rel (%p398) target = $region40
        $region39: #{tpu_custom_call.1} parent=27 // pred_region
          %s401 = smul.u32 2, %s27
          %s403 = ssub.s32 256, 256
          %404 = vsyncadd %s394, %s403
          %s405 = smul.addr %s26, 2
          %s406 = sadd.s32 %s401, %s405
          %s407 = smul.addr %s406, 128
          %s408 = scalar_lea.hbm %s2, %s407
          %s409 = sshll.u32 %s397, 4
          %s410 = int_to_ptr.vmem [resolvable:$true] %s409
          %415 = dma.vmem_to_hbm [thread:$0]  %s410, 256, %s408, %s394, 128, 128, 8
        $region40: #{tpu_custom_call.1} parent=27 // pred_fallthru
          _
      $region28: #{tpu_custom_call.1} parent=5 // pred_fallthru
        _
      %p416 = scmp.le.s32.totalorder 2, %s17
      // Predicated region
      $region41: #{tpu_custom_call.1} parent=5 // pred_check
        %p417 = pneg %p416
      $region42: #{tpu_custom_call.1} parent=5 // pred_check_branch
        %419 = sbr.rel (%p417) target = $region44
      $region43: #{tpu_custom_call.1} parent=5 // pred_region
        %s420 = ssub.s32 %s17, 2
        // Predicated region
        $region45: #{tpu_custom_call.1} parent=43 // pred_check
          %p421 = pneg %p116
        $region46: #{tpu_custom_call.1} parent=43 // pred_check_branch
          %423 = sbr.rel (%p421) target = $region48
        $region47: #{tpu_custom_call.1} parent=43 // pred_region
          %s424 = sand.u32 %s101, 1
          %s425 = scalar_lea.sflag [#allocation4], %s424
          %s426 = sand.u32 %s101, 1
          %s427 = smul.addr %s426, 16
          %s428 = scalar_lea.vmem [#allocation7], %s427
          %429 = dma.done %s425, 256
        $region48: #{tpu_custom_call.1} parent=43 // pred_fallthru
          _
      $region44: #{tpu_custom_call.1} parent=5 // pred_fallthru
        _
    $region6: #{tpu_custom_call.1} parent=1 // loop_footer
      %s21 = sadd.s32 1, %s17
    $region7: #{tpu_custom_call.1} parent=1 // loop_footer_branch
      %16 = sbr.rel target = $region3
    $region8: #{tpu_custom_call.1} parent=1 // loop_exit
      _
    %430 = vsyncpa [#allocation3], 1
    %s431 = scalar_lea.sflag [#allocation3], 1
    %432 = vsyncpa %s431, 1
    %433 = vsyncpa [#allocation6], 1
    %s434 = scalar_lea.sflag [#allocation6], 1
    %435 = vsyncpa %s434, 1
    %436 = vsyncpa [#allocation4], 1
    %s437 = scalar_lea.sflag [#allocation4], 1
    %438 = vsyncpa %s437, 1

</llo_original>
